<compile_context>
chip_gen: v5e
topology: v5e:2x2
jax: 0.10.0
libtpu: 0.0.40
codegen_flags: <defaults>
</compile_context>

<pallas_src>
import math

import jax
import jax.numpy as jnp
from jax.experimental import pallas as pl
from jax.experimental.pallas import tpu as pltpu

LANE = 128                      # TPU vreg lane width (batch lives on lanes)
_HALF_LOG_2PI = 0.5 * math.log(2.0 * math.pi)


def _round_up(n, m):
    return ((n + m - 1) // m) * m


# ---------------------------------------------------------------------------
# Kernel
# ---------------------------------------------------------------------------
def _make_kernel(d_in, d_out, two_h, w_offs, v_offs, compute_dtype):
    three_d = 3 * d_out
    ow1, ow2, ow3 = w_offs
    ob1, ob2, ob3, osc, onl = v_offs

    def kernel(x_ref, eps_ref, w_ref, vec_ref, out_ref):
        # Feature-major: features on sublanes, batch on the 128-lane axis.
        x = x_ref[...].astype(compute_dtype)             # (Din, TB)
        eps = eps_ref[...]                               # (Dout, TB) f32

        # Static, aligned views into the resident packed slabs.
        w1 = w_ref[ow1:ow1 + two_h, 0:d_in]              # (2H, Din)  fused layer 1
        w2 = w_ref[ow2:ow2 + two_h, 0:two_h]             # (2H, 2H)   block-diagonal
        w3 = w_ref[ow3:ow3 + three_d, 0:two_h]           # (3D, 2H)   stacked heads

        b1 = vec_ref[ob1:ob1 + two_h, :]                 # (2H, 1) -> broadcast over lanes
        b2 = vec_ref[ob2:ob2 + two_h, :]
        b3 = vec_ref[ob3:ob3 + three_d, :]
        scales = vec_ref[osc:osc + d_out, :]             # exp(clamp(sigma, min_log_std))
        nlognorm = vec_ref[onl:onl + d_out, :]           # -log(scale) - 0.5*log(2*pi)

        # Fused trunk: 3 MXU matmuls cover both branches, f32 accumulation.
        h1 = jnp.maximum(
            jnp.dot(w1, x, preferred_element_type=jnp.float32) + b1, 0.0)
        h2 = jnp.maximum(
            jnp.dot(w2, h1.astype(compute_dtype),
                    preferred_element_type=jnp.float32) + b2, 0.0)
        z3 = jnp.dot(w3, h2.astype(compute_dtype),
                     preferred_element_type=jnp.float32) + b3

        means = jnp.tanh(z3[0:d_out, :])                 # controller head
        instinct = jnp.tanh(z3[d_out:2 * d_out, :])      # instinct action head
        zg = z3[2 * d_out:three_d, :]                    # instinct gate logits

        # Robust log(sigmoid(zg)) straight from the logits; recover control with
        # one exp (no -inf on gate underflow, one fewer transcendental chain).
        log_control = jnp.minimum(zg, 0.0) - jnp.log(1.0 + jnp.exp(-jnp.abs(zg)))
        control = jnp.exp(log_control)

        # Controller: Normal(means, scales) sample and exact log_prob (eps given).
        stoch_action = means + scales * eps
        log_prob = nlognorm - 0.5 * (eps * eps)

        # Direct, lane-dense head stores (no concat / relayout).
        out_ref[0:d_out, :] = stoch_action * control + instinct * (1.0 - control)
        out_ref[d_out:2 * d_out, :] = log_prob + log_control
        out_ref[2 * d_out:three_d, :] = control

    return kernel


# ---------------------------------------------------------------------------
# Parameter packing (done once, outside the kernel)
# ---------------------------------------------------------------------------
def pack_params(p, *, min_std=1e-6):
    """Fuse controller + instinct into a feature-major (W^T) block-diagonal
    matmul chain; pack weights and biases/constants into two slabs."""
    d_in, h = p["cw1"].shape
    d_out = p["cw3"].shape[1]
    two_h, three_d = 2 * h, 3 * d_out

    ROW = 16                                   # clean sublane packing for f32 AND bf16
    r1 = _round_up(two_h, ROW)
    r2 = _round_up(two_h, ROW)
    r3 = _round_up(three_d, ROW)
    width = max(d_in, two_h)

    # Layer 1: (2H, Din) = [cw1^T ; iw1^T]
    w1_t = jnp.concatenate([p["cw1"].T, p["iw1"].T], axis=0)
    # Layer 2: block-diagonal (2H, 2H).  NOTE: if H is ever scaled up past the
    # MXU tile width, split this back into two HxH matmuls (half the FLOPs here
    # are on structural zeros; free slack at H=32).
    w2_t = jnp.zeros((two_h, two_h), jnp.float32)
    w2_t = w2_t.at[0:h, 0:h].set(p["cw2"].T).at[h:, h:].set(p["iw2"].T)
    # Layer 3: three heads stacked on rows, (3D, 2H).
    w3_t = jnp.zeros((three_d, two_h), jnp.float32)
    w3_t = w3_t.at[0:d_out, 0:h].set(p["cw3"].T)
    w3_t = w3_t.at[d_out:2 * d_out, h:].set(p["iw3a"].T)
    w3_t = w3_t.at[2 * d_out:, h:].set(p["iw3c"].T)

    def _pad(w, rows):
        return jnp.pad(w, ((0, rows - w.shape[0]), (0, width - w.shape[1])))

    w_slab = jnp.concatenate([_pad(w1_t, r1), _pad(w2_t, r2), _pad(w3_t, r3)], axis=0)

    # Per-feature column vectors; sigma clamp/exp and the Normal log-prob
    # constant are precomputed here (grid-invariant work hoisted out of kernel).
    log_scales = jnp.maximum(p["sigma"], math.log(min_std))
    sections = [
        jnp.concatenate([p["cb1"], p["ib1"]]),
        jnp.concatenate([p["cb2"], p["ib2"]]),
        jnp.concatenate([p["cb3"], p["ib3a"], p["ib3c"]]),
        jnp.exp(log_scales),                          # scales
        -(log_scales + _HALF_LOG_2PI),                # -log(scale) - 0.5*log(2*pi)
    ]
    v_offs, rows = [], 0
    for v in sections:
        v_offs.append(rows)
        rows += _round_up(v.shape[0], 8)
    vec_slab = jnp.zeros((rows, 1), jnp.float32)
    for off, v in zip(v_offs, sections):
        vec_slab = vec_slab.at[off:off + v.shape[0], 0].set(v)

    meta = dict(d_in=d_in, h=h, d_out=d_out,
                w_offs=(0, r1, r1 + r2), v_offs=tuple(v_offs))
    return w_slab, vec_slab, meta


# ---------------------------------------------------------------------------
# Wrapper
# ---------------------------------------------------------------------------
def controller_combinator_forward(x, eps_fm, w_slab, vec_slab, meta, *,
                                  tile_b=4096, use_bf16=False,
                                  x_feature_major=False):
    """x: (B, Din) f32 (or (Din, B) if x_feature_major=True).
    eps_fm: (Dout, B) f32 standard-normal noise, feature-major."""
    d_in, d_out, h = meta["d_in"], meta["d_out"], meta["h"]
    two_h, three_d = 2 * h, 3 * d_out

    x_fm = x if x_feature_major else x.T            # tiny layout plumbing; callers on a
    B = x_fm.shape[1]                               # hot path can pass feature-major x.
    assert x_fm.shape[0] == d_in and eps_fm.shape == (d_out, B)

    # Batch lives on the 128-lane axis -> tile is a multiple of 128.
    b_ceil = _round_up(B, LANE)
    tile = min(_round_up(tile_b, LANE), b_ceil)
    if b_ceil >= 2 * LANE:                          # keep >=2 grid steps: v7x has 2 TCs
        tile = min(tile, _round_up(b_ceil // 2, LANE))
    b_pad = _round_up(B, tile)
    if b_pad != B:                                  # cold path; pick B % tile == 0 in deployment
        x_fm = jnp.pad(x_fm, ((0, 0), (0, b_pad - B)))
        eps_fm = jnp.pad(eps_fm, ((0, 0), (0, b_pad - B)))

    compute_dtype = jnp.bfloat16 if use_bf16 else jnp.float32
    w_in = w_slab.astype(jnp.bfloat16) if use_bf16 else w_slab  # biases/scales stay f32

    kernel = _make_kernel(d_in, d_out, two_h, meta["w_offs"], meta["v_offs"],
                          compute_dtype)

    flops = 2 * b_pad * (d_in * two_h + two_h * two_h + two_h * three_d)
    bytes_accessed = int(4 * (x_fm.size + eps_fm.size + b_pad * three_d
                              + vec_slab.size)
                         + w_in.size * w_in.dtype.itemsize)
    cost = pl.CostEstimate(flops=flops, transcendentals=5 * b_pad * d_out,
                           bytes_accessed=bytes_accessed)

    out_fm = pl.pallas_call(
        kernel,
        out_shape=jax.ShapeDtypeStruct((three_d, b_pad), jnp.float32),
        grid=(b_pad // tile,),
        in_specs=[
            pl.BlockSpec((d_in, tile), lambda i: (0, i)),    # x tile (streamed)
            pl.BlockSpec((d_out, tile), lambda i: (0, i)),   # eps tile (streamed)
            pl.BlockSpec(w_in.shape, lambda i: (0, 0)),      # weights (VMEM-resident)
            pl.BlockSpec(vec_slab.shape, lambda i: (0, 0)),  # biases/consts (resident)
        ],
        out_specs=pl.BlockSpec((three_d, tile), lambda i: (0, i)),  # lane-dense output
        compiler_params=pltpu.CompilerParams(dimension_semantics=("parallel",)),
        cost_estimate=cost,
    )(x_fm, eps_fm, w_in, vec_slab)

    out = out_fm[:, :B].T                           # (B, 3D) -> split the three heads
    return out[:, 0:d_out], out[:, d_out:2 * d_out], out[:, 2 * d_out:three_d]


# ---------------------------------------------------------------------------
# Init (matches PyTorch: xavier_uniform weights, zero biases, sigma=log(init_std))
# ---------------------------------------------------------------------------
def xavier_uniform(key, fan_in, fan_out):
    bound = math.sqrt(6.0 / (fan_in + fan_out))
    return jax.random.uniform(key, (fan_in, fan_out), jnp.float32, -bound, bound)


def init_params(key, d_in, h, d_out, init_std=0.1):
    ks = jax.random.split(key, 7)
    return {
        "cw1": xavier_uniform(ks[0], d_in, h), "cb1": jnp.zeros((h,), jnp.float32),
        "cw2": xavier_uniform(ks[1], h, h),    "cb2": jnp.zeros((h,), jnp.float32),
        "cw3": xavier_uniform(ks[2], h, d_out), "cb3": jnp.zeros((d_out,), jnp.float32),
        "iw1": xavier_uniform(ks[3], d_in, h), "ib1": jnp.zeros((h,), jnp.float32),
        "iw2": xavier_uniform(ks[4], h, h),    "ib2": jnp.zeros((h,), jnp.float32),
        "iw3a": xavier_uniform(ks[5], h, d_out), "ib3a": jnp.zeros((d_out,), jnp.float32),
        "iw3c": xavier_uniform(ks[6], h, d_out), "ib3c": jnp.zeros((d_out,), jnp.float32),
        "sigma": jnp.full((d_out,), math.log(init_std), jnp.float32),
    }


# ---------------------------------------------------------------------------
# Pure-JAX reference (mirrors the PyTorch module exactly)
# ---------------------------------------------------------------------------
def reference_forward(x, eps, p, min_std=1e-6):
    hi = jax.lax.Precision.HIGHEST

    def lin(a, w, b):
        return jnp.dot(a, w, precision=hi) + b

    hc = jnp.maximum(lin(x, p["cw1"], p["cb1"]), 0.0)
    hc = jnp.maximum(lin(hc, p["cw2"], p["cb2"]), 0.0)
    means = jnp.tanh(lin(hc, p["cw3"], p["cb3"]))
    log_scales = jnp.maximum(p["sigma"], math.log(min_std))
    scales = jnp.exp(log_scales)
    action = means + scales * eps
    log_prob = (-((action - means) ** 2) / (2.0 * scales ** 2)
                - jnp.log(scales) - 0.5 * math.log(2.0 * math.pi))

    hi_ = jnp.maximum(lin(x, p["iw1"], p["ib1"]), 0.0)
    hi_ = jnp.maximum(lin(hi_, p["iw2"], p["ib2"]), 0.0)
    inst = jnp.tanh(lin(hi_, p["iw3a"], p["ib3a"]))
    control = jax.nn.sigmoid(lin(hi_, p["iw3c"], p["ib3c"]))

    final = action * control + inst * (1.0 - control)
    return final, log_prob + jnp.log(control), control


if __name__ == "__main__":
    D_in, H, D_out = 12, 32, 8
    B = 64

    root = jax.random.PRNGKey(0)
    k_params, k_x, k_eps, k_x2, k_eps2 = jax.random.split(root, 5)

    params = init_params(k_params, D_in, H, D_out, init_std=0.1)
    w_slab, vec_slab, meta = pack_params(params, min_std=1e-6)

    # Noise is generated feature-major (Dout, B): lane-dense, no transpose/pad.
    x = jax.random.normal(k_x, (B, D_in), dtype=jnp.float32)
    eps_fm = jax.random.normal(k_eps, (D_out, B), dtype=jnp.float32)

    fa, lp, ct = controller_combinator_forward(x, eps_fm, w_slab, vec_slab, meta,
                                               tile_b=4096, use_bf16=False)
    jax.block_until_ready((fa, lp, ct))

    fa_ref, lp_ref, ct_ref = reference_forward(x, eps_fm.T, params, min_std=1e-6)
    assert jnp.allclose(fa, fa_ref, atol=2e-5, rtol=2e-5)
    assert jnp.allclose(lp, lp_ref, atol=2e-5, rtol=2e-5)
    assert jnp.allclose(ct, ct_ref, atol=2e-5, rtol=2e-5)

    # Multi-tile / padded-batch path (>=2 grid steps -> exercises v7x sharding).
    B2 = 300
    x2 = jax.random.normal(k_x2, (B2, D_in), dtype=jnp.float32)
    eps2 = jax.random.normal(k_eps2, (D_out, B2), dtype=jnp.float32)
    fa2, lp2, ct2 = controller_combinator_forward(x2, eps2, w_slab, vec_slab, meta)
    fa2_ref, lp2_ref, ct2_ref = reference_forward(x2, eps2.T, params)
    assert jnp.allclose(fa2, fa2_ref, atol=2e-5, rtol=2e-5)
    assert jnp.allclose(lp2, lp2_ref, atol=2e-5, rtol=2e-5)
    assert jnp.allclose(ct2, ct2_ref, atol=2e-5, rtol=2e-5)

    # bf16 operand path (v6e/v7x recommendation); loose tolerance vs f32 reference.
    fa3, lp3, ct3 = controller_combinator_forward(x2, eps2, w_slab, vec_slab, meta,
                                                  use_bf16=True)
    jax.block_until_ready((fa3, lp3, ct3))
    assert jnp.allclose(fa3, fa2_ref, atol=1e-1, rtol=1e-1)
    assert jnp.allclose(lp3, lp2_ref, atol=1e-1, rtol=1e-1)
    assert jnp.allclose(ct3, ct2_ref, atol=1e-1, rtol=1e-1)

    print("KERNEL_OK")
</pallas_src>

<mosaic_0001>
module attributes {stable_mosaic.version = 11 : i64} {
  func.func @kernel(%arg0: i32, %arg1: memref<12x128xf32, #tpu.memory_space<vmem>>, %arg2: memref<8x128xf32, #tpu.memory_space<vmem>>, %arg3: memref<160x64xf32, #tpu.memory_space<vmem>>, %arg4: memref<168x1xf32, #tpu.memory_space<vmem>>, %arg5: memref<24x128xf32, #tpu.memory_space<vmem>>) attributes {dimension_semantics = [#tpu.dimension_semantics<parallel>], iteration_bounds = array<i64: 1>, scalar_prefetch = 0 : i64, scratch_operands = 0 : i64, tpu.core_type = #tpu.core_type<tc>, window_params = [{transform_indices = @transform_0, window_bounds = array<i64: 12, 128>}, {transform_indices = @transform_1, window_bounds = array<i64: 8, 128>}, {pipeline_mode = #tpu.pipeline_mode<synchronous>, transform_indices = @transform_2, window_bounds = array<i64: 160, 64>}, {pipeline_mode = #tpu.pipeline_mode<synchronous>, transform_indices = @transform_3, window_bounds = array<i64: 168, 1>}, {transform_indices = @transform_4, window_bounds = array<i64: 24, 128>}]} {
    %c0 = arith.constant 0 : index
    %c0_0 = arith.constant 0 : index
    %0 = vector.load %arg1[%c0, %c0_0] : memref<12x128xf32, #tpu.memory_space<vmem>>, vector<12x128xf32>
    %c0_1 = arith.constant 0 : index
    %c0_2 = arith.constant 0 : index
    %1 = vector.load %arg2[%c0_1, %c0_2] : memref<8x128xf32, #tpu.memory_space<vmem>>, vector<8x128xf32>
    %c0_3 = arith.constant 0 : index
    %c0_4 = arith.constant 0 : index
    %2 = vector.load %arg3[%c0_3, %c0_4] : memref<160x64xf32, #tpu.memory_space<vmem>>, vector<64x12xf32>
    %c64 = arith.constant 64 : index
    %c0_5 = arith.constant 0 : index
    %3 = vector.load %arg3[%c64, %c0_5] : memref<160x64xf32, #tpu.memory_space<vmem>>, vector<64x64xf32>
    %c128 = arith.constant 128 : index
    %c0_6 = arith.constant 0 : index
    %4 = vector.load %arg3[%c128, %c0_6] : memref<160x64xf32, #tpu.memory_space<vmem>>, vector<24x64xf32>
    %c0_7 = arith.constant 0 : index
    %c0_8 = arith.constant 0 : index
    %5 = vector.load %arg4[%c0_7, %c0_8] : memref<168x1xf32, #tpu.memory_space<vmem>>, vector<64x1xf32>
    %c64_9 = arith.constant 64 : index
    %c0_10 = arith.constant 0 : index
    %6 = vector.load %arg4[%c64_9, %c0_10] : memref<168x1xf32, #tpu.memory_space<vmem>>, vector<64x1xf32>
    %c128_11 = arith.constant 128 : index
    %c0_12 = arith.constant 0 : index
    %7 = vector.load %arg4[%c128_11, %c0_12] : memref<168x1xf32, #tpu.memory_space<vmem>>, vector<24x1xf32>
    %c152 = arith.constant 152 : index
    %c0_13 = arith.constant 0 : index
    %8 = vector.load %arg4[%c152, %c0_13] : memref<168x1xf32, #tpu.memory_space<vmem>>, vector<8x1xf32>
    %c160 = arith.constant 160 : index
    %c0_14 = arith.constant 0 : index
    %9 = vector.load %arg4[%c160, %c0_14] : memref<168x1xf32, #tpu.memory_space<vmem>>, vector<8x1xf32>
    %cst = arith.constant dense<0.000000e+00> : vector<64x128xf32>
    %10 = tpu.matmul %2, %0, %cst {dimension_numbers = #tpu.dot_dimension_numbers<[1], [0], [0], [1], [0, 0, 1, 1], [], []>} : vector<64x12xf32>, vector<12x128xf32>, vector<64x128xf32> -> vector<64x128xf32>
    %11 = vector.broadcast %5 : vector<64x1xf32> to vector<64x128xf32>
    %12 = arith.addf %10, %11 : vector<64x128xf32>
    %cst_15 = arith.constant 0.000000e+00 : f32
    %13 = vector.broadcast %cst_15 : f32 to vector<64x128xf32>
    %14 = arith.maximumf %12, %13 : vector<64x128xf32>
    %cst_16 = arith.constant dense<0.000000e+00> : vector<64x128xf32>
    %15 = tpu.matmul %3, %14, %cst_16 {dimension_numbers = #tpu.dot_dimension_numbers<[1], [0], [0], [1], [0, 0, 1, 1], [], []>} : vector<64x64xf32>, vector<64x128xf32>, vector<64x128xf32> -> vector<64x128xf32>
    %16 = vector.broadcast %6 : vector<64x1xf32> to vector<64x128xf32>
    %17 = arith.addf %15, %16 : vector<64x128xf32>
    %cst_17 = arith.constant 0.000000e+00 : f32
    %18 = vector.broadcast %cst_17 : f32 to vector<64x128xf32>
    %19 = arith.maximumf %17, %18 : vector<64x128xf32>
    %cst_18 = arith.constant dense<0.000000e+00> : vector<24x128xf32>
    %20 = tpu.matmul %4, %19, %cst_18 {dimension_numbers = #tpu.dot_dimension_numbers<[1], [0], [0], [1], [0, 0, 1, 1], [], []>} : vector<24x64xf32>, vector<64x128xf32>, vector<24x128xf32> -> vector<24x128xf32>
    %21 = vector.broadcast %7 : vector<24x1xf32> to vector<24x128xf32>
    %22 = arith.addf %20, %21 : vector<24x128xf32>
    %23 = vector.extract_strided_slice %22 {offsets = [0, 0], sizes = [8, 128], strides = [1, 1]} : vector<24x128xf32> to vector<8x128xf32>
    %24 = math.tanh %23 : vector<8x128xf32>
    %25 = vector.extract_strided_slice %22 {offsets = [8, 0], sizes = [8, 128], strides = [1, 1]} : vector<24x128xf32> to vector<8x128xf32>
    %26 = math.tanh %25 : vector<8x128xf32>
    %27 = vector.extract_strided_slice %22 {offsets = [16, 0], sizes = [8, 128], strides = [1, 1]} : vector<24x128xf32> to vector<8x128xf32>
    %cst_19 = arith.constant 0.000000e+00 : f32
    %28 = vector.broadcast %cst_19 : f32 to vector<8x128xf32>
    %29 = arith.minimumf %27, %28 : vector<8x128xf32>
    %30 = math.absf %27 : vector<8x128xf32>
    %cst_20 = arith.constant 0.000000e+00 : f32
    %31 = vector.broadcast %cst_20 : f32 to vector<8x128xf32>
    %32 = arith.subf %31, %30 : vector<8x128xf32>
    %33 = math.exp %32 : vector<8x128xf32>
    %cst_21 = arith.constant 1.000000e+00 : f32
    %34 = vector.broadcast %cst_21 : f32 to vector<8x128xf32>
    %35 = arith.addf %34, %33 : vector<8x128xf32>
    %36 = math.log %35 : vector<8x128xf32>
    %37 = arith.subf %29, %36 : vector<8x128xf32>
    %38 = math.exp %37 : vector<8x128xf32>
    %39 = vector.broadcast %8 : vector<8x1xf32> to vector<8x128xf32>
    %40 = arith.mulf %39, %1 : vector<8x128xf32>
    %41 = arith.addf %24, %40 : vector<8x128xf32>
    %42 = arith.mulf %1, %1 : vector<8x128xf32>
    %cst_22 = arith.constant 5.000000e-01 : f32
    %43 = vector.broadcast %cst_22 : f32 to vector<8x128xf32>
    %44 = arith.mulf %43, %42 : vector<8x128xf32>
    %45 = vector.broadcast %9 : vector<8x1xf32> to vector<8x128xf32>
    %46 = arith.subf %45, %44 : vector<8x128xf32>
    %47 = arith.mulf %41, %38 : vector<8x128xf32>
    %cst_23 = arith.constant 1.000000e+00 : f32
    %48 = vector.broadcast %cst_23 : f32 to vector<8x128xf32>
    %49 = arith.subf %48, %38 : vector<8x128xf32>
    %50 = arith.mulf %26, %49 : vector<8x128xf32>
    %51 = arith.addf %47, %50 : vector<8x128xf32>
    %c0_24 = arith.constant 0 : index
    %c0_25 = arith.constant 0 : index
    %52 = vector.load %arg5[%c0_24, %c0_25] : memref<24x128xf32, #tpu.memory_space<vmem>>, vector<8x128xf32>
    tpu.vector_store %arg5[%c0_24, %c0_25], %51 {strides = array<i32>} : memref<24x128xf32, #tpu.memory_space<vmem>>, vector<8x128xf32>,
    %53 = arith.addf %46, %37 : vector<8x128xf32>
    %c8 = arith.constant 8 : index
    %c0_26 = arith.constant 0 : index
    %54 = vector.load %arg5[%c8, %c0_26] : memref<24x128xf32, #tpu.memory_space<vmem>>, vector<8x128xf32>
    tpu.vector_store %arg5[%c8, %c0_26], %53 {strides = array<i32>} : memref<24x128xf32, #tpu.memory_space<vmem>>, vector<8x128xf32>,
    %c16 = arith.constant 16 : index
    %c0_27 = arith.constant 0 : index
    %55 = vector.load %arg5[%c16, %c0_27] : memref<24x128xf32, #tpu.memory_space<vmem>>, vector<8x128xf32>
    tpu.vector_store %arg5[%c16, %c0_27], %38 {strides = array<i32>} : memref<24x128xf32, #tpu.memory_space<vmem>>, vector<8x128xf32>,
    return
  }
  func.func @transform_0(%arg0: i32) -> (i32, i32) {
    %c0_i32 = arith.constant 0 : i32
    %c0_i32_0 = arith.constant 0 : i32
    return %c0_i32, %arg0 : i32, i32
  }
  func.func @transform_1(%arg0: i32) -> (i32, i32) {
    %c0_i32 = arith.constant 0 : i32
    %c0_i32_0 = arith.constant 0 : i32
    return %c0_i32, %arg0 : i32, i32
  }
  func.func @transform_2(%arg0: i32) -> (i32, i32) {
    %c0_i32 = arith.constant 0 : i32
    %c0_i32_0 = arith.constant 0 : i32
    %c0_i32_1 = arith.constant 0 : i32
    return %c0_i32, %c0_i32_0 : i32, i32
  }
  func.func @transform_3(%arg0: i32) -> (i32, i32) {
    %c0_i32 = arith.constant 0 : i32
    %c0_i32_0 = arith.constant 0 : i32
    %c0_i32_1 = arith.constant 0 : i32
    return %c0_i32, %c0_i32_0 : i32, i32
  }
  func.func @transform_4(%arg0: i32) -> (i32, i32) {
    %c0_i32 = arith.constant 0 : i32
    %c0_i32_0 = arith.constant 0 : i32
    return %c0_i32, %arg0 : i32, i32
  }
}

</mosaic_0001>

<llo_original>
// kernel: tpu_custom_call.1
$region0: #{tpu_custom_call.1}
  #allocation0 [shape = 'u32[]', space=smem, size = 0x4, offset = 0x4, fixed_abs, tag = 'smem constant byte address 0x4 - core index']
  #allocation1 [shape = 'u32[72,128]{1,0:T(1,128)}', space=vmem, size = 0x9000, scoped, tag = 'internal scratch']
  %s0 = inlined_call_operand.vmem [shape: f32[12,128], index: 0, kind: input, shape index: {}]
  %s1 = inlined_call_operand.vmem [shape: f32[8,128], index: 1, kind: input, shape index: {}]
  %s2 = inlined_call_operand.vmem [shape: f32[160,64], index: 2, kind: input, shape index: {}]
  %s3 = inlined_call_operand.vmem [shape: f32[168,1], index: 3, kind: input, shape index: {}]
  %s4 = inlined_call_operand.hbm [shape: f32[24,128], index: 4, kind: output, shape index: {}]
  %s5 = sld [smem:[#allocation0]]
  $region26: #{tpu_custom_call.1} parent=0
    _
  %s7 = ssub.s32 1, %s5
  %s8 = scalar_select 0, %s7, %s5
  $region1: #{tpu_custom_call.1} parent=0
    #allocation2 [shape = 'u8[12288]{0}', space=vmem, size = 0x3000, scoped, tag = 'output window, operand 0, single buffered']
    #allocation3 [shape = 's32[1]{0}', space=sflag, size = 0x4, scoped, tag = 'scoped memory for tpu_custom_call.1']
    %9 = vsyncpa [#allocation3], 0
    // Predicated region
    $region2: #{tpu_custom_call.1} parent=1 // pred_check
      _
    $region3: #{tpu_custom_call.1} parent=1 // pred_check_branch
      %11 = sbr.rel (0) target = $region5
    $region4: #{tpu_custom_call.1} parent=1 // pred_region
      _
    $region5: #{tpu_custom_call.1} parent=1 // pred_fallthru
      _
    // Predicated region
    $region6: #{tpu_custom_call.1} parent=1 // pred_check
      _
    $region7: #{tpu_custom_call.1} parent=1 // pred_check_branch
      %13 = sbr.rel (0) target = $region9
    $region8: #{tpu_custom_call.1} parent=1 // pred_region
      _
    $region9: #{tpu_custom_call.1} parent=1 // pred_fallthru
      _
    // Predicated region
    $region10: #{tpu_custom_call.1} parent=1 // pred_check
      _
    $region11: #{tpu_custom_call.1} parent=1 // pred_check_branch
      %15 = sbr.rel (0) target = $region13
    $region12: #{tpu_custom_call.1} parent=1 // pred_region
      _
    $region13: #{tpu_custom_call.1} parent=1 // pred_fallthru
      _
    // Predicated region
    $region14: #{tpu_custom_call.1} parent=1 // pred_check
      _
    $region15: #{tpu_custom_call.1} parent=1 // pred_check_branch
      %17 = sbr.rel (0) target = $region17
    $region16: #{tpu_custom_call.1} parent=1 // pred_region
      _
    $region17: #{tpu_custom_call.1} parent=1 // pred_fallthru
      _
    %v18 = vld [vmem:[%s0] sm:$0xff]
    %v19 = vld [vmem:[%s0 + $0x8] sm:$0xf]
    %v20 = vld [vmem:[%s1] sm:$0xff]
    %v21 = vld [vmem:[%s2] sm:$0xff]
    %v22 = vld [vmem:[%s2 + $0x8] sm:$0xff]
    %v23 = vld [vmem:[%s2 + $0x10] sm:$0xff]
    %v24 = vld [vmem:[%s2 + $0x18] sm:$0xff]
    %v25 = vld [vmem:[%s2 + $0x20] sm:$0xff]
    %v26 = vld [vmem:[%s2 + $0x28] sm:$0xff]
    %v27 = vld [vmem:[%s2 + $0x30] sm:$0xff]
    %v28 = vld [vmem:[%s2 + $0x38] sm:$0xff]
    %v29 = vld [vmem:[%s2 + $0x40] sm:$0xff]
    %v30 = vld [vmem:[%s2 + $0x48] sm:$0xff]
    %v31 = vld [vmem:[%s2 + $0x50] sm:$0xff]
    %v32 = vld [vmem:[%s2 + $0x58] sm:$0xff]
    %v33 = vld [vmem:[%s2 + $0x60] sm:$0xff]
    %v34 = vld [vmem:[%s2 + $0x68] sm:$0xff]
    %v35 = vld [vmem:[%s2 + $0x70] sm:$0xff]
    %v36 = vld [vmem:[%s2 + $0x78] sm:$0xff]
    %v37 = vld [vmem:[%s2 + $0x80] sm:$0xff]
    %v38 = vld [vmem:[%s2 + $0x88] sm:$0xff]
    %v39 = vld [vmem:[%s2 + $0x90] sm:$0xff]
    %v40 = vld [vmem:[%s3] sm:$0xff]
    %v41 = vld [vmem:[%s3 + $0x8] sm:$0xff]
    %v42 = vld [vmem:[%s3 + $0x10] sm:$0xff]
    %v43 = vld [vmem:[%s3 + $0x18] sm:$0xff]
    %v44 = vld [vmem:[%s3 + $0x20] sm:$0xff]
    %v45 = vld [vmem:[%s3 + $0x28] sm:$0xff]
    %v46 = vld [vmem:[%s3 + $0x30] sm:$0xff]
    %v47 = vld [vmem:[%s3 + $0x38] sm:$0xff]
    %v48 = vld [vmem:[%s3 + $0x40] sm:$0xff]
    %v49 = vld [vmem:[%s3 + $0x48] sm:$0xff]
    %v50 = vld [vmem:[%s3 + $0x50] sm:$0xff]
    %v51 = vld [vmem:[%s3 + $0x58] sm:$0xff]
    %v52 = vld [vmem:[%s3 + $0x60] sm:$0xff]
    %v53 = vld [vmem:[%s3 + $0x68] sm:$0xff]
    %v54 = vld [vmem:[%s3 + $0x70] sm:$0xff]
    %v55 = vld [vmem:[%s3 + $0x78] sm:$0xff]
    %v56 = vld [vmem:[%s3 + $0x80] sm:$0xff]
    %v57 = vld [vmem:[%s3 + $0x88] sm:$0xff]
    %v58 = vld [vmem:[%s3 + $0x90] sm:$0xff]
    %v59 = vld [vmem:[%s3 + $0x98] sm:$0xff]
    %v60 = vld [vmem:[%s3 + $0xa0] sm:$0xff]
    %62 = vset.pattern.permute.xlu0 0
    %63 = vperm.xlu0 %62, %v40
    %v64 = vpop.permute.xlu0 %63
    %67 = vset.pattern.permute.xlu0 0
    %68 = vperm.xlu0 %67, %v41
    %v69 = vpop.permute.xlu0 %68
    %72 = vset.pattern.permute.xlu0 0
    %73 = vperm.xlu0 %72, %v42
    %v74 = vpop.permute.xlu0 %73
    %77 = vset.pattern.permute.xlu0 0
    %78 = vperm.xlu0 %77, %v43
    %v79 = vpop.permute.xlu0 %78
    %82 = vset.pattern.permute.xlu0 0
    %83 = vperm.xlu0 %82, %v44
    %v84 = vpop.permute.xlu0 %83
    %87 = vset.pattern.permute.xlu0 0
    %88 = vperm.xlu0 %87, %v45
    %v89 = vpop.permute.xlu0 %88
    %92 = vset.pattern.permute.xlu0 0
    %93 = vperm.xlu0 %92, %v46
    %v94 = vpop.permute.xlu0 %93
    %97 = vset.pattern.permute.xlu0 0
    %98 = vperm.xlu0 %97, %v47
    %v99 = vpop.permute.xlu0 %98
    %vm101 = vcmask 97280
    %v103 = vsel %vm101, %v21, 0
    %v106 = vsel %vm101, %v22, 0
    %v109 = vsel %vm101, %v23, 0
    %v112 = vsel %vm101, %v24, 0
    %v115 = vsel %vm101, %v25, 0
    %v118 = vsel %vm101, %v26, 0
    %v121 = vsel %vm101, %v27, 0
    %v124 = vsel %vm101, %v28, 0
    %vm126 = vcmask 1043456
    %v128 = vsel %vm126, %v19, 0
    %130 = vmatpush.msra.mxu0 0.0
    %131 = vmatpush.msra.mxu0 0.0
    %132 = vmatpush.msra.mxu0 0.0
    %133 = vmatpush.msra.mxu0 0.0
    %134 = vmatpush.msra.mxu0 0.0
    %135 = vmatpush.msra.mxu0 0.0
    %136 = vmatpush.msra.mxu0 0.0
    %137 = vmatpush.msra.mxu0 0.0
    %138 = vmatpush.msra.mxu0 0.0
    %139 = vmatpush.msra.mxu0 0.0
    %140 = vmatpush.msra.mxu0 0.0
    %141 = vmatpush.msra.mxu0 0.0
    %142 = vmatpush.msra.mxu0 0.0
    %143 = vmatpush.msra.mxu0 0.0
    %144 = vmatpush.msra.mxu0 %v128
    %145 = vmatpush.msra.mxu0 %v18
    %146 = vmatmul.f32.gmra.mxu0 %v103
    %v147 = vpop.f32.mrf.mxu0
    %v148 = vadd.f32 %v64, %v147
    %149 = vmatmul.f32.gmra.mxu0 %v106
    %v150 = vpop.f32.mrf.mxu0
    %v151 = vadd.f32 %v69, %v150
    %152 = vmatmul.f32.gmra.mxu0 %v109
    %v153 = vpop.f32.mrf.mxu0
    %v154 = vadd.f32 %v74, %v153
    %155 = vmatmul.f32.gmra.mxu0 %v112
    %v156 = vpop.f32.mrf.mxu0
    %v157 = vadd.f32 %v79, %v156
    %158 = vmatmul.f32.gmra.mxu0 %v115
    %v159 = vpop.f32.mrf.mxu0
    %v160 = vadd.f32 %v84, %v159
    %161 = vmatmul.f32.gmra.mxu0 %v118
    %v162 = vpop.f32.mrf.mxu0
    %v163 = vadd.f32 %v89, %v162
    %164 = vmatmul.f32.gmra.mxu0 %v121
    %v165 = vpop.f32.mrf.mxu0
    %v166 = vadd.f32 %v94, %v165
    %167 = vmatmul.f32.gmra.mxu0 %v124
    %v168 = vpop.f32.mrf.mxu0
    %v169 = vadd.f32 %v99, %v168
    %170 = vdwg.mxu0
    %v171 = vmax.f32 %v148, 0.0
    %v172 = vmax.f32 %v151, 0.0
    %v173 = vmax.f32 %v154, 0.0
    %v174 = vmax.f32 %v157, 0.0
    %v175 = vmax.f32 %v160, 0.0
    %v176 = vmax.f32 %v163, 0.0
    %v177 = vmax.f32 %v166, 0.0
    %v178 = vmax.f32 %v169, 0.0
    %180 = vset.pattern.permute.xlu0 0
    %181 = vperm.xlu0 %180, %v48
    %v182 = vpop.permute.xlu0 %181
    %185 = vset.pattern.permute.xlu0 0
    %186 = vperm.xlu0 %185, %v49
    %v187 = vpop.permute.xlu0 %186
    %190 = vset.pattern.permute.xlu0 0
    %191 = vperm.xlu0 %190, %v50
    %v192 = vpop.permute.xlu0 %191
    %195 = vset.pattern.permute.xlu0 0
    %196 = vperm.xlu0 %195, %v51
    %v197 = vpop.permute.xlu0 %196
    %200 = vset.pattern.permute.xlu0 0
    %201 = vperm.xlu0 %200, %v52
    %v202 = vpop.permute.xlu0 %201
    %205 = vset.pattern.permute.xlu0 0
    %206 = vperm.xlu0 %205, %v53
    %v207 = vpop.permute.xlu0 %206
    %210 = vset.pattern.permute.xlu0 0
    %211 = vperm.xlu0 %210, %v54
    %v212 = vpop.permute.xlu0 %211
    %215 = vset.pattern.permute.xlu0 0
    %216 = vperm.xlu0 %215, %v55
    %v217 = vpop.permute.xlu0 %216
    %vm219 = vcmask 523264
    %v221 = vsel %vm219, %v29, 0
    %v224 = vsel %vm219, %v30, 0
    %v227 = vsel %vm219, %v31, 0
    %v230 = vsel %vm219, %v32, 0
    %v233 = vsel %vm219, %v33, 0
    %v236 = vsel %vm219, %v34, 0
    %v239 = vsel %vm219, %v35, 0
    %v242 = vsel %vm219, %v36, 0
    %244 = vmatpush.msra.mxu0 0.0
    %245 = vmatpush.msra.mxu0 0.0
    %246 = vmatpush.msra.mxu0 0.0
    %247 = vmatpush.msra.mxu0 0.0
    %248 = vmatpush.msra.mxu0 0.0
    %249 = vmatpush.msra.mxu0 0.0
    %250 = vmatpush.msra.mxu0 0.0
    %251 = vmatpush.msra.mxu0 0.0
    %252 = vmatpush.msra.mxu0 %v178
    %253 = vmatpush.msra.mxu0 %v177
    %254 = vmatpush.msra.mxu0 %v176
    %255 = vmatpush.msra.mxu0 %v175
    %256 = vmatpush.msra.mxu0 %v174
    %257 = vmatpush.msra.mxu0 %v173
    %258 = vmatpush.msra.mxu0 %v172
    %259 = vmatpush.msra.mxu0 %v171
    %260 = vmatmul.f32.gmra.mxu0 %v221
    %v261 = vpop.f32.mrf.mxu0
    %v262 = vadd.f32 %v182, %v261
    %263 = vmatmul.f32.gmra.mxu0 %v224
    %v264 = vpop.f32.mrf.mxu0
    %v265 = vadd.f32 %v187, %v264
    %266 = vmatmul.f32.gmra.mxu0 %v227
    %v267 = vpop.f32.mrf.mxu0
    %v268 = vadd.f32 %v192, %v267
    %269 = vmatmul.f32.gmra.mxu0 %v230
    %v270 = vpop.f32.mrf.mxu0
    %v271 = vadd.f32 %v197, %v270
    %272 = vmatmul.f32.gmra.mxu0 %v233
    %v273 = vpop.f32.mrf.mxu0
    %v274 = vadd.f32 %v202, %v273
    %275 = vmatmul.f32.gmra.mxu0 %v236
    %v276 = vpop.f32.mrf.mxu0
    %v277 = vadd.f32 %v207, %v276
    %278 = vmatmul.f32.gmra.mxu0 %v239
    %v279 = vpop.f32.mrf.mxu0
    %v280 = vadd.f32 %v212, %v279
    %281 = vmatmul.f32.gmra.mxu0 %v242
    %v282 = vpop.f32.mrf.mxu0
    %v283 = vadd.f32 %v217, %v282
    %284 = vdwg.mxu0
    %v285 = vmax.f32 %v262, 0.0
    %v286 = vmax.f32 %v265, 0.0
    %v287 = vmax.f32 %v268, 0.0
    %v288 = vmax.f32 %v271, 0.0
    %v289 = vmax.f32 %v274, 0.0
    %v290 = vmax.f32 %v277, 0.0
    %v291 = vmax.f32 %v280, 0.0
    %v292 = vmax.f32 %v283, 0.0
    %294 = vset.pattern.permute.xlu0 0
    %295 = vperm.xlu0 %294, %v56
    %v296 = vpop.permute.xlu0 %295
    %299 = vset.pattern.permute.xlu0 0
    %300 = vperm.xlu0 %299, %v57
    %v301 = vpop.permute.xlu0 %300
    %304 = vset.pattern.permute.xlu0 0
    %305 = vperm.xlu0 %304, %v58
    %v306 = vpop.permute.xlu0 %305
    %v309 = vsel %vm219, %v37, 0
    %v312 = vsel %vm219, %v38, 0
    %v315 = vsel %vm219, %v39, 0
    %317 = vmatpush.msra.mxu0 0.0
    %318 = vmatpush.msra.mxu0 0.0
    %319 = vmatpush.msra.mxu0 0.0
    %320 = vmatpush.msra.mxu0 0.0
    %321 = vmatpush.msra.mxu0 0.0
    %322 = vmatpush.msra.mxu0 0.0
    %323 = vmatpush.msra.mxu0 0.0
    %324 = vmatpush.msra.mxu0 0.0
    %325 = vmatpush.msra.mxu0 %v292
    %326 = vmatpush.msra.mxu0 %v291
    %327 = vmatpush.msra.mxu0 %v290
    %328 = vmatpush.msra.mxu0 %v289
    %329 = vmatpush.msra.mxu0 %v288
    %330 = vmatpush.msra.mxu0 %v287
    %331 = vmatpush.msra.mxu0 %v286
    %332 = vmatpush.msra.mxu0 %v285
    %333 = vmatmul.f32.gmra.mxu0 %v309
    %v334 = vpop.f32.mrf.mxu0
    %v335 = vadd.f32 %v296, %v334
    %336 = vmatmul.f32.gmra.mxu0 %v312
    %v337 = vpop.f32.mrf.mxu0
    %v338 = vadd.f32 %v301, %v337
    %339 = vmatmul.f32.gmra.mxu0 %v315
    %v340 = vpop.f32.mrf.mxu0
    %v341 = vadd.f32 %v306, %v340
    %342 = vdwg.mxu0
    %v343 = vtanh.pop %v335
    %v344 = vtanh.pop %v338
    %v345 = vmin.f32 %v341, 0.0
    %v346 = vand.u32 2147483647, %v341
    %v347 = vsub.f32 0.0, %v346
    %v348 = vmul.f32 %v347, 1.442695
    %v349 = vpow.pop %v348
    %v350 = vadd.f32 %v349, 1.0
    %v351 = vlog2.pop %v350
    %v352 = vmul.f32 %v351, 0.6931472
    %v353 = vsub.f32 %v345, %v352
    %v354 = vmul.f32 %v353, 1.442695
    %v355 = vpow.pop %v354
    %357 = vset.pattern.permute.xlu0 0
    %358 = vperm.xlu0 %357, %v59
    %v359 = vpop.permute.xlu0 %358
    %v361 = vmul.f32 %v359, %v20
    %v362 = vadd.f32 %v343, %v361
    %v363 = vmul.f32 %v20, %v20
    %v364 = vmul.f32 %v363, 0.5
    %366 = vset.pattern.permute.xlu0 0
    %367 = vperm.xlu0 %366, %v60
    %v368 = vpop.permute.xlu0 %367
    %v370 = vsub.f32 %v368, %v364
    %v371 = vmul.f32 %v362, %v355
    %v372 = vsub.f32 1.0, %v355
    %v373 = vmul.f32 %v344, %v372
    %v374 = vadd.f32 %v371, %v373
    %375 = vst [vmem:[#allocation2] sm:$0xff] %v374
    %v376 = vadd.f32 %v370, %v353
    %377 = vst [vmem:[#allocation2 + $0x8] sm:$0xff] %v376
    %378 = vst [vmem:[#allocation2 + $0x10] sm:$0xff] %v355
    // Predicated region
    $region18: #{tpu_custom_call.1} parent=1 // pred_check
      _
    $region19: #{tpu_custom_call.1} parent=1 // pred_check_branch
      %380 = sbr.rel (0) target = $region21
    $region20: #{tpu_custom_call.1} parent=1 // pred_region
      %382 = vsyncadd [#allocation3], 0
      %s383 = sshll.u32 [#allocation2], 4
      %s384 = int_to_ptr.vmem [resolvable:$true] %s383
      %s385 = sshll.u32 %s4, 4
      %s386 = int_to_ptr.hbm [resolvable:$true] %s385
      %391 = dma.vmem_to_hbm [thread:$0]  %s384, 384, %s386, [#allocation3], 128, 128, 8
    $region21: #{tpu_custom_call.1} parent=1 // pred_fallthru
      _
    // Predicated region
    $region22: #{tpu_custom_call.1} parent=1 // pred_check
      _
    $region23: #{tpu_custom_call.1} parent=1 // pred_check_branch
      %393 = sbr.rel (0) target = $region25
    $region24: #{tpu_custom_call.1} parent=1 // pred_region
      %395 = dma.done [#allocation3], 384
    $region25: #{tpu_custom_call.1} parent=1 // pred_fallthru
      _
    %396 = vsyncpa [#allocation3], 1

</llo_original>
